<compile_context>
chip_gen: v7x
topology: tpu7x:2x2x1
jax: 0.10.0
libtpu: 0.0.40
codegen_flags: <defaults>
</compile_context>

<pallas_src>
import math

import jax
import jax.numpy as jnp
from jax.experimental import pallas as pl
from jax.experimental.pallas import tpu as pltpu

TM = 8       # destination-row tile (grid axis, "parallel")
PAD = 128    # lane-dense padded width for all feature dims (in / hidden / out)


def _round_up(x, m):
    return (x + m - 1) // m * m


def _pad2(x, rows, cols):
    return jnp.pad(x, ((0, rows - x.shape[0]), (0, cols - x.shape[1])))


# --------------------------- fused layer kernel ------------------------------

def _make_fused_layer_kernel(node_types, edge_types, tm, fuse_lin, pk_idx):
    """One kernel = one HeteroConv layer (+ optional fused final Linear)."""
    n_nt = len(node_types)
    n_et = len(edge_types)
    nt_idx = {nt: i for i, nt in enumerate(node_types)}

    def kernel(*refs):
        k = 0
        x_refs = refs[k:k + n_nt]; k += n_nt           # (N_pad, PAD) f32, full
        a_refs = refs[k:k + n_et]; k += n_et           # (TM, N_pad) f32 row block
        w_refs = refs[k:k + n_et]; k += n_et           # (2*PAD, PAD) stacked [W_l; W_r]
        b_refs = refs[k:k + n_et]; k += n_et           # (1, PAD)
        if fuse_lin:
            wlin_ref, blin_ref = refs[k], refs[k + 1]; k += 2
        out_refs = refs[k:k + n_nt]; k += n_nt         # (TM, PAD) row block
        if fuse_lin:
            lin_out_ref = refs[k]; k += 1

        row0 = pl.multiple_of(pl.program_id(0) * tm, tm)

        # Sum over edge types (HeteroConv aggr='sum'), fully inside the kernel.
        acc = {}
        for e, (src, _, dst) in enumerate(edge_types):
            a_blk = a_refs[e][...].astype(jnp.bfloat16)                   # (tm, N_pad)
            x_src = x_refs[nt_idx[src]][...].astype(jnp.bfloat16)         # (N_pad, PAD)
            agg = jnp.dot(a_blk, x_src, preferred_element_type=jnp.float32)
            x_dst = x_refs[nt_idx[dst]][pl.ds(row0, tm), :].astype(jnp.bfloat16)
            cat = jnp.concatenate([agg.astype(jnp.bfloat16), x_dst], axis=-1)
            contrib = jnp.dot(cat, w_refs[e][...].astype(jnp.bfloat16),
                              preferred_element_type=jnp.float32) + b_refs[e][...]
            acc[dst] = contrib if dst not in acc else acc[dst] + contrib

        for t, nt in enumerate(node_types):
            if nt in acc:
                y = acc[nt]
                y = jnp.where(y >= 0, y, jnp.float32(0.01) * y)   # leaky_relu(0.01)
            else:
                # TODO(synk): PyG HeteroConv drops node types that receive no
                # messages; we keep them carrying zeros so shapes stay static.
                y = jnp.zeros(out_refs[t].shape, out_refs[t].dtype)
            out_refs[t][...] = y
            if fuse_lin and t == pk_idx:
                # dropout is identity in eval mode, so lin(leaky_relu(.)) is exact.
                lin_out_ref[...] = (
                    jnp.dot(y.astype(jnp.bfloat16),
                            wlin_ref[...].astype(jnp.bfloat16),
                            preferred_element_type=jnp.float32)
                    + blin_ref[...])

    return kernel


def fused_hetero_layer(x_list, a_list, wcat_list, b_list, node_types, edge_types,
                       *, fuse_lin=False, pk_idx=None, w_lin=None, b_lin=None):
    """One pallas_call: full HeteroConv layer (+ optional fused final Linear)."""
    n_pad, f_pad = x_list[0].shape
    h_pad = wcat_list[0].shape[1]
    grid = (n_pad // TM,)

    const2 = lambda i: (0, 0)   # resident across the row grid (no re-DMA)
    rowblk = lambda i: (i, 0)

    in_specs = []
    in_specs += [pl.BlockSpec((n_pad, f_pad), const2) for _ in x_list]
    in_specs += [pl.BlockSpec((TM, n_pad), rowblk) for _ in a_list]
    in_specs += [pl.BlockSpec((2 * f_pad, h_pad), const2) for _ in wcat_list]
    in_specs += [pl.BlockSpec((1, h_pad), const2) for _ in b_list]
    args = list(x_list) + list(a_list) + list(wcat_list) + list(b_list)

    out_specs = [pl.BlockSpec((TM, h_pad), rowblk) for _ in node_types]
    out_shape = [jax.ShapeDtypeStruct((n_pad, h_pad), jnp.float32) for _ in node_types]

    if fuse_lin:
        o_pad = w_lin.shape[1]
        in_specs += [pl.BlockSpec((h_pad, o_pad), const2),
                     pl.BlockSpec((1, o_pad), const2)]
        args += [w_lin, b_lin]
        out_specs += [pl.BlockSpec((TM, o_pad), rowblk)]
        out_shape += [jax.ShapeDtypeStruct((n_pad, o_pad), jnp.float32)]

    # Advisory cost hint for the XLA scheduler.
    flops = 0
    for _ in edge_types:
        flops += 2 * n_pad * n_pad * f_pad            # A @ x_src
        flops += 2 * n_pad * (2 * f_pad) * h_pad      # [agg | x_dst] @ Wcat
    if fuse_lin:
        flops += 2 * n_pad * h_pad * w_lin.shape[1]
    bytes_accessed = (sum(int(a.size) * 4 for a in args)
                      + sum(int(math.prod(s.shape)) * 4 for s in out_shape))
    cost = pl.CostEstimate(flops=flops, transcendentals=0,
                           bytes_accessed=bytes_accessed)

    kernel = _make_fused_layer_kernel(node_types, edge_types, TM, fuse_lin, pk_idx)
    return pl.pallas_call(
        kernel,
        grid=grid,
        in_specs=in_specs,
        out_specs=tuple(out_specs),
        out_shape=tuple(out_shape),
        compiler_params=pltpu.CompilerParams(
            dimension_semantics=("parallel",),
            vmem_limit_bytes=32 * 1024 * 1024,
        ),
        cost_estimate=cost,
    )(*args)


# ------------------------------ plain-JAX glue --------------------------------

def build_mean_adj(edge_index, n_dst, n_src):
    """Dense row-normalized adjacency: A[d, s] = 1/deg(d) for each edge s->d."""
    src, dst = edge_index[0], edge_index[1]
    a = jnp.zeros((n_dst, n_src), jnp.float32).at[dst, src].add(1.0)
    deg = a.sum(axis=1, keepdims=True)
    return a / jnp.maximum(deg, 1.0)
    # TODO(synk): for large graphs replace this dense O(N^2) A with a
    # scalar-prefetched CSR gather (PrefetchScalarGridSpec) to fit v7x VMEM.


def hetero_gnn_forward(x_pad_list, a_pad_list, conv_params, lin_params,
                       node_types, edge_types, pk_idx):
    num_layers = len(conv_params)
    lin_out = None
    for li, layer in enumerate(conv_params):
        last = li == num_layers - 1
        outs = fused_hetero_layer(
            x_pad_list, a_pad_list, layer["Wcat"], layer["b"],
            node_types, edge_types,
            fuse_lin=last, pk_idx=pk_idx,
            w_lin=lin_params["W"] if last else None,
            b_lin=lin_params["b"] if last else None)
        if last:
            x_pad_list = list(outs[:-1])
            lin_out = outs[-1]
        else:
            x_pad_list = list(outs)
    return lin_out


# ----------------------------------- main --------------------------------------

if __name__ == "__main__":
    key = jax.random.PRNGKey(0)

    node_types = ["user", "item"]
    edge_types = [
        ("user", "buys", "item"),
        ("item", "rev_buys", "user"),
        ("user", "follows", "user"),
    ]
    pk = "user"
    pk_idx = node_types.index(pk)

    N = {"user": 16, "item": 12}
    F_in = {"user": 8, "item": 8}
    hidden = 16
    out_channels = 4
    num_layers = 2

    N_pad = _round_up(max(N.values()), TM)     # common padded node count (16)

    # Node features.
    key, k1, k2 = jax.random.split(key, 3)
    x_dict = {
        "user": jax.random.normal(k1, (N["user"], F_in["user"]), jnp.float32),
        "item": jax.random.normal(k2, (N["item"], F_in["item"]), jnp.float32),
    }
    x_pad_list = [_pad2(x_dict[nt], N_pad, PAD) for nt in node_types]

    # Edge indices (2, E): row 0 = src node ids, row 1 = dst node ids.
    E = {("user", "buys", "item"): 24,
         ("item", "rev_buys", "user"): 24,
         ("user", "follows", "user"): 20}
    edge_index_dict = {}
    for et in edge_types:
        src_t, _, dst_t = et
        key, ks, kd = jax.random.split(key, 3)
        s = jax.random.randint(ks, (E[et],), 0, N[src_t])
        d = jax.random.randint(kd, (E[et],), 0, N[dst_t])
        edge_index_dict[et] = jnp.stack([s, d])

    # Mean-aggregation matrices, padded to the common node count (zero rows /
    # columns for padded nodes contribute nothing).
    a_pad_list = [
        _pad2(build_mean_adj(edge_index_dict[et], N[et[2]], N[et[0]]), N_pad, N_pad)
        for et in edge_types
    ]

    # Deterministic synthetic parameters, padded / pre-stacked once on the host.
    def init(k, shape, scale=0.1):
        return scale * jax.random.normal(k, shape, jnp.float32)

    conv_params = []
    dims = dict(F_in)
    for _ in range(num_layers):
        wcat_list, b_list = [], []
        for et in edge_types:
            src_t, _, dst_t = et
            key, ka, kb, kc = jax.random.split(key, 4)
            W_l = init(ka, (dims[src_t], hidden))   # neighbour transform (+bias)
            b_l = init(kb, (hidden,))
            W_r = init(kc, (dims[dst_t], hidden))   # root transform (no bias)
            wcat_list.append(jnp.concatenate(
                [_pad2(W_l, PAD, PAD), _pad2(W_r, PAD, PAD)], axis=0))  # (2*PAD, PAD)
            b_list.append(_pad2(b_l.reshape(1, -1), 1, PAD))
        conv_params.append({"Wcat": wcat_list, "b": b_list})
        dims = {nt: hidden for nt in node_types}

    key, kw, kbb = jax.random.split(key, 3)
    lin_params = {
        "W": _pad2(init(kw, (hidden, out_channels)), PAD, PAD),
        "b": _pad2(init(kbb, (out_channels,)).reshape(1, -1), 1, PAD),
    }

    lin_out_pad = hetero_gnn_forward(x_pad_list, a_pad_list, conv_params,
                                     lin_params, node_types, edge_types, pk_idx)
    lin_out_pad = jax.block_until_ready(lin_out_pad)

    out = lin_out_pad[:N[pk], :out_channels]   # slice logical rows/cols back out
    assert out.shape == (N[pk], out_channels), out.shape
    assert bool(jnp.all(jnp.isfinite(out)))
    print("KERNEL_OK")
</pallas_src>

<mosaic_0001>
module attributes {stable_mosaic.version = 11 : i64} {
  func.func @kernel(%arg0: i32, %arg1: memref<16x128xf32, #tpu.memory_space<vmem>>, %arg2: memref<16x128xf32, #tpu.memory_space<vmem>>, %arg3: memref<8x16xf32, #tpu.memory_space<vmem>>, %arg4: memref<8x16xf32, #tpu.memory_space<vmem>>, %arg5: memref<8x16xf32, #tpu.memory_space<vmem>>, %arg6: memref<256x128xf32, #tpu.memory_space<vmem>>, %arg7: memref<256x128xf32, #tpu.memory_space<vmem>>, %arg8: memref<256x128xf32, #tpu.memory_space<vmem>>, %arg9: memref<1x128xf32, #tpu.memory_space<vmem>>, %arg10: memref<1x128xf32, #tpu.memory_space<vmem>>, %arg11: memref<1x128xf32, #tpu.memory_space<vmem>>, %arg12: memref<8x128xf32, #tpu.memory_space<vmem>>, %arg13: memref<8x128xf32, #tpu.memory_space<vmem>>) attributes {dimension_semantics = [#tpu.dimension_semantics<parallel>], iteration_bounds = array<i64: 2>, scalar_prefetch = 0 : i64, scratch_operands = 0 : i64, tpu.core_type = #tpu.core_type<tc>, window_params = [{pipeline_mode = #tpu.pipeline_mode<synchronous>, transform_indices = @transform_0, window_bounds = array<i64: 16, 128>}, {pipeline_mode = #tpu.pipeline_mode<synchronous>, transform_indices = @transform_1, window_bounds = array<i64: 16, 128>}, {transform_indices = @transform_2, window_bounds = array<i64: 8, 16>}, {transform_indices = @transform_3, window_bounds = array<i64: 8, 16>}, {transform_indices = @transform_4, window_bounds = array<i64: 8, 16>}, {pipeline_mode = #tpu.pipeline_mode<synchronous>, transform_indices = @transform_5, window_bounds = array<i64: 256, 128>}, {pipeline_mode = #tpu.pipeline_mode<synchronous>, transform_indices = @transform_6, window_bounds = array<i64: 256, 128>}, {pipeline_mode = #tpu.pipeline_mode<synchronous>, transform_indices = @transform_7, window_bounds = array<i64: 256, 128>}, {pipeline_mode = #tpu.pipeline_mode<synchronous>, transform_indices = @transform_8, window_bounds = array<i64: 1, 128>}, {pipeline_mode = #tpu.pipeline_mode<synchronous>, transform_indices = @transform_9, window_bounds = array<i64: 1, 128>}, {pipeline_mode = #tpu.pipeline_mode<synchronous>, transform_indices = @transform_10, window_bounds = array<i64: 1, 128>}, {transform_indices = @transform_11, window_bounds = array<i64: 8, 128>}, {transform_indices = @transform_12, window_bounds = array<i64: 8, 128>}]} {
    %c8_i32 = arith.constant 8 : i32
    %0 = arith.muli %arg0, %c8_i32 : i32
    %1 = tpu.assume_multiple %0, 8 : i32
    %c0 = arith.constant 0 : index
    %c0_0 = arith.constant 0 : index
    %2 = vector.load %arg3[%c0, %c0_0] : memref<8x16xf32, #tpu.memory_space<vmem>>, vector<8x16xf32>
    %3 = arith.truncf %2 : vector<8x16xf32> to vector<8x16xbf16>
    %c0_1 = arith.constant 0 : index
    %c0_2 = arith.constant 0 : index
    %4 = vector.load %arg1[%c0_1, %c0_2] : memref<16x128xf32, #tpu.memory_space<vmem>>, vector<16x128xf32>
    %5 = arith.truncf %4 : vector<16x128xf32> to vector<16x128xbf16>
    %cst = arith.constant dense<0.000000e+00> : vector<8x128xf32>
    %6 = tpu.matmul %3, %5, %cst {dimension_numbers = #tpu.dot_dimension_numbers<[1], [0], [0], [1], [0, 0, 1, 1], [], []>} : vector<8x16xbf16>, vector<16x128xbf16>, vector<8x128xf32> -> vector<8x128xf32>
    %7 = arith.index_cast %1 : i32 to index
    %c0_3 = arith.constant 0 : index
    %8 = vector.load %arg2[%7, %c0_3] : memref<16x128xf32, #tpu.memory_space<vmem>>, vector<8x128xf32>
    %9 = arith.truncf %8 : vector<8x128xf32> to vector<8x128xbf16>
    %10 = arith.truncf %6 : vector<8x128xf32> to vector<8x128xbf16>
    %11 = tpu.concatenate %10, %9 in 1 : vector<8x128xbf16>, vector<8x128xbf16> -> vector<8x256xbf16>
    %c0_4 = arith.constant 0 : index
    %c0_5 = arith.constant 0 : index
    %12 = vector.load %arg6[%c0_4, %c0_5] : memref<256x128xf32, #tpu.memory_space<vmem>>, vector<256x128xf32>
    %13 = arith.truncf %12 : vector<256x128xf32> to vector<256x128xbf16>
    %cst_6 = arith.constant dense<0.000000e+00> : vector<8x128xf32>
    %14 = tpu.matmul %11, %13, %cst_6 {dimension_numbers = #tpu.dot_dimension_numbers<[1], [0], [0], [1], [0, 0, 1, 1], [], []>} : vector<8x256xbf16>, vector<256x128xbf16>, vector<8x128xf32> -> vector<8x128xf32>
    %c0_7 = arith.constant 0 : index
    %c0_8 = arith.constant 0 : index
    %15 = vector.load %arg9[%c0_7, %c0_8] : memref<1x128xf32, #tpu.memory_space<vmem>>, vector<1x128xf32>
    %16 = vector.broadcast %15 : vector<1x128xf32> to vector<8x128xf32>
    %17 = arith.addf %14, %16 : vector<8x128xf32>
    %c0_9 = arith.constant 0 : index
    %c0_10 = arith.constant 0 : index
    %18 = vector.load %arg4[%c0_9, %c0_10] : memref<8x16xf32, #tpu.memory_space<vmem>>, vector<8x16xf32>
    %19 = arith.truncf %18 : vector<8x16xf32> to vector<8x16xbf16>
    %c0_11 = arith.constant 0 : index
    %c0_12 = arith.constant 0 : index
    %20 = vector.load %arg2[%c0_11, %c0_12] : memref<16x128xf32, #tpu.memory_space<vmem>>, vector<16x128xf32>
    %21 = arith.truncf %20 : vector<16x128xf32> to vector<16x128xbf16>
    %cst_13 = arith.constant dense<0.000000e+00> : vector<8x128xf32>
    %22 = tpu.matmul %19, %21, %cst_13 {dimension_numbers = #tpu.dot_dimension_numbers<[1], [0], [0], [1], [0, 0, 1, 1], [], []>} : vector<8x16xbf16>, vector<16x128xbf16>, vector<8x128xf32> -> vector<8x128xf32>
    %23 = arith.index_cast %1 : i32 to index
    %c0_14 = arith.constant 0 : index
    %24 = vector.load %arg1[%23, %c0_14] : memref<16x128xf32, #tpu.memory_space<vmem>>, vector<8x128xf32>
    %25 = arith.truncf %24 : vector<8x128xf32> to vector<8x128xbf16>
    %26 = arith.truncf %22 : vector<8x128xf32> to vector<8x128xbf16>
    %27 = tpu.concatenate %26, %25 in 1 : vector<8x128xbf16>, vector<8x128xbf16> -> vector<8x256xbf16>
    %c0_15 = arith.constant 0 : index
    %c0_16 = arith.constant 0 : index
    %28 = vector.load %arg7[%c0_15, %c0_16] : memref<256x128xf32, #tpu.memory_space<vmem>>, vector<256x128xf32>
    %29 = arith.truncf %28 : vector<256x128xf32> to vector<256x128xbf16>
    %cst_17 = arith.constant dense<0.000000e+00> : vector<8x128xf32>
    %30 = tpu.matmul %27, %29, %cst_17 {dimension_numbers = #tpu.dot_dimension_numbers<[1], [0], [0], [1], [0, 0, 1, 1], [], []>} : vector<8x256xbf16>, vector<256x128xbf16>, vector<8x128xf32> -> vector<8x128xf32>
    %c0_18 = arith.constant 0 : index
    %c0_19 = arith.constant 0 : index
    %31 = vector.load %arg10[%c0_18, %c0_19] : memref<1x128xf32, #tpu.memory_space<vmem>>, vector<1x128xf32>
    %32 = vector.broadcast %31 : vector<1x128xf32> to vector<8x128xf32>
    %33 = arith.addf %30, %32 : vector<8x128xf32>
    %c0_20 = arith.constant 0 : index
    %c0_21 = arith.constant 0 : index
    %34 = vector.load %arg5[%c0_20, %c0_21] : memref<8x16xf32, #tpu.memory_space<vmem>>, vector<8x16xf32>
    %35 = arith.truncf %34 : vector<8x16xf32> to vector<8x16xbf16>
    %c0_22 = arith.constant 0 : index
    %c0_23 = arith.constant 0 : index
    %36 = vector.load %arg1[%c0_22, %c0_23] : memref<16x128xf32, #tpu.memory_space<vmem>>, vector<16x128xf32>
    %37 = arith.truncf %36 : vector<16x128xf32> to vector<16x128xbf16>
    %cst_24 = arith.constant dense<0.000000e+00> : vector<8x128xf32>
    %38 = tpu.matmul %35, %37, %cst_24 {dimension_numbers = #tpu.dot_dimension_numbers<[1], [0], [0], [1], [0, 0, 1, 1], [], []>} : vector<8x16xbf16>, vector<16x128xbf16>, vector<8x128xf32> -> vector<8x128xf32>
    %39 = arith.index_cast %1 : i32 to index
    %c0_25 = arith.constant 0 : index
    %40 = vector.load %arg1[%39, %c0_25] : memref<16x128xf32, #tpu.memory_space<vmem>>, vector<8x128xf32>
    %41 = arith.truncf %40 : vector<8x128xf32> to vector<8x128xbf16>
    %42 = arith.truncf %38 : vector<8x128xf32> to vector<8x128xbf16>
    %43 = tpu.concatenate %42, %41 in 1 : vector<8x128xbf16>, vector<8x128xbf16> -> vector<8x256xbf16>
    %c0_26 = arith.constant 0 : index
    %c0_27 = arith.constant 0 : index
    %44 = vector.load %arg8[%c0_26, %c0_27] : memref<256x128xf32, #tpu.memory_space<vmem>>, vector<256x128xf32>
    %45 = arith.truncf %44 : vector<256x128xf32> to vector<256x128xbf16>
    %cst_28 = arith.constant dense<0.000000e+00> : vector<8x128xf32>
    %46 = tpu.matmul %43, %45, %cst_28 {dimension_numbers = #tpu.dot_dimension_numbers<[1], [0], [0], [1], [0, 0, 1, 1], [], []>} : vector<8x256xbf16>, vector<256x128xbf16>, vector<8x128xf32> -> vector<8x128xf32>
    %c0_29 = arith.constant 0 : index
    %c0_30 = arith.constant 0 : index
    %47 = vector.load %arg11[%c0_29, %c0_30] : memref<1x128xf32, #tpu.memory_space<vmem>>, vector<1x128xf32>
    %48 = vector.broadcast %47 : vector<1x128xf32> to vector<8x128xf32>
    %49 = arith.addf %46, %48 : vector<8x128xf32>
    %50 = arith.addf %33, %49 : vector<8x128xf32>
    %cst_31 = arith.constant 0.000000e+00 : f32
    %51 = vector.broadcast %cst_31 : f32 to vector<8x128xf32>
    %52 = arith.cmpf oge, %50, %51 : vector<8x128xf32>
    %cst_32 = arith.constant 0.00999999977 : f32
    %53 = vector.broadcast %cst_32 : f32 to vector<8x128xf32>
    %54 = arith.mulf %53, %50 : vector<8x128xf32>
    %55 = arith.select %52, %50, %54 : vector<8x128xi1>, vector<8x128xf32>
    %c0_33 = arith.constant 0 : index
    %c0_34 = arith.constant 0 : index
    %56 = vector.load %arg12[%c0_33, %c0_34] : memref<8x128xf32, #tpu.memory_space<vmem>>, vector<8x128xf32>
    tpu.vector_store %arg12[%c0_33, %c0_34], %55 {strides = array<i32>} : memref<8x128xf32, #tpu.memory_space<vmem>>, vector<8x128xf32>,
    %cst_35 = arith.constant 0.000000e+00 : f32
    %57 = vector.broadcast %cst_35 : f32 to vector<8x128xf32>
    %58 = arith.cmpf oge, %17, %57 : vector<8x128xf32>
    %cst_36 = arith.constant 0.00999999977 : f32
    %59 = vector.broadcast %cst_36 : f32 to vector<8x128xf32>
    %60 = arith.mulf %59, %17 : vector<8x128xf32>
    %61 = arith.select %58, %17, %60 : vector<8x128xi1>, vector<8x128xf32>
    %c0_37 = arith.constant 0 : index
    %c0_38 = arith.constant 0 : index
    %62 = vector.load %arg13[%c0_37, %c0_38] : memref<8x128xf32, #tpu.memory_space<vmem>>, vector<8x128xf32>
    tpu.vector_store %arg13[%c0_37, %c0_38], %61 {strides = array<i32>} : memref<8x128xf32, #tpu.memory_space<vmem>>, vector<8x128xf32>,
    return
  }
  func.func @transform_0(%arg0: i32) -> (i32, i32) {
    %c0_i32 = arith.constant 0 : i32
    %c0_i32_0 = arith.constant 0 : i32
    %c0_i32_1 = arith.constant 0 : i32
    return %c0_i32, %c0_i32_0 : i32, i32
  }
  func.func @transform_1(%arg0: i32) -> (i32, i32) {
    %c0_i32 = arith.constant 0 : i32
    %c0_i32_0 = arith.constant 0 : i32
    %c0_i32_1 = arith.constant 0 : i32
    return %c0_i32, %c0_i32_0 : i32, i32
  }
  func.func @transform_2(%arg0: i32) -> (i32, i32) {
    %c0_i32 = arith.constant 0 : i32
    %c0_i32_0 = arith.constant 0 : i32
    return %arg0, %c0_i32 : i32, i32
  }
  func.func @transform_3(%arg0: i32) -> (i32, i32) {
    %c0_i32 = arith.constant 0 : i32
    %c0_i32_0 = arith.constant 0 : i32
    return %arg0, %c0_i32 : i32, i32
  }
  func.func @transform_4(%arg0: i32) -> (i32, i32) {
    %c0_i32 = arith.constant 0 : i32
    %c0_i32_0 = arith.constant 0 : i32
    return %arg0, %c0_i32 : i32, i32
  }
  func.func @transform_5(%arg0: i32) -> (i32, i32) {
    %c0_i32 = arith.constant 0 : i32
    %c0_i32_0 = arith.constant 0 : i32
    %c0_i32_1 = arith.constant 0 : i32
    return %c0_i32, %c0_i32_0 : i32, i32
  }
  func.func @transform_6(%arg0: i32) -> (i32, i32) {
    %c0_i32 = arith.constant 0 : i32
    %c0_i32_0 = arith.constant 0 : i32
    %c0_i32_1 = arith.constant 0 : i32
    return %c0_i32, %c0_i32_0 : i32, i32
  }
  func.func @transform_7(%arg0: i32) -> (i32, i32) {
    %c0_i32 = arith.constant 0 : i32
    %c0_i32_0 = arith.constant 0 : i32
    %c0_i32_1 = arith.constant 0 : i32
    return %c0_i32, %c0_i32_0 : i32, i32
  }
  func.func @transform_8(%arg0: i32) -> (i32, i32) {
    %c0_i32 = arith.constant 0 : i32
    %c0_i32_0 = arith.constant 0 : i32
    %c0_i32_1 = arith.constant 0 : i32
    return %c0_i32, %c0_i32_0 : i32, i32
  }
  func.func @transform_9(%arg0: i32) -> (i32, i32) {
    %c0_i32 = arith.constant 0 : i32
    %c0_i32_0 = arith.constant 0 : i32
    %c0_i32_1 = arith.constant 0 : i32
    return %c0_i32, %c0_i32_0 : i32, i32
  }
  func.func @transform_10(%arg0: i32) -> (i32, i32) {
    %c0_i32 = arith.constant 0 : i32
    %c0_i32_0 = arith.constant 0 : i32
    %c0_i32_1 = arith.constant 0 : i32
    return %c0_i32, %c0_i32_0 : i32, i32
  }
  func.func @transform_11(%arg0: i32) -> (i32, i32) {
    %c0_i32 = arith.constant 0 : i32
    %c0_i32_0 = arith.constant 0 : i32
    return %arg0, %c0_i32 : i32, i32
  }
  func.func @transform_12(%arg0: i32) -> (i32, i32) {
    %c0_i32 = arith.constant 0 : i32
    %c0_i32_0 = arith.constant 0 : i32
    return %arg0, %c0_i32 : i32, i32
  }
}

</mosaic_0001>

<llo_original>
// kernel: tpu_custom_call.1
$region0: #{tpu_custom_call.1}
  #allocation0 [shape = 'u32[]', space=smem, size = 0x4, offset = 0x4, fixed_abs, tag = 'smem constant byte address 0x4 - core index']
  #allocation1 [shape = 'u32[144,128]{1,0:T(1,128)}', space=vmem, size = 0x12000, scoped, tag = 'internal scratch']
  %s0 = inlined_call_operand.hbm [shape: f32[16,128], index: 0, kind: input, shape index: {}]
  %s1 = inlined_call_operand.hbm [shape: f32[16,128], index: 1, kind: input, shape index: {}]
  %s2 = inlined_call_operand.hbm [shape: f32[16,16], index: 2, kind: input, shape index: {}]
  %s3 = inlined_call_operand.hbm [shape: f32[16,16], index: 3, kind: input, shape index: {}]
  %s4 = inlined_call_operand.hbm [shape: f32[16,16], index: 4, kind: input, shape index: {}]
  %s5 = inlined_call_operand.hbm [shape: f32[256,128], index: 5, kind: input, shape index: {}]
  %s6 = inlined_call_operand.hbm [shape: f32[256,128], index: 6, kind: input, shape index: {}]
  %s7 = inlined_call_operand.hbm [shape: f32[256,128], index: 7, kind: input, shape index: {}]
  %s8 = inlined_call_operand.vmem [shape: f32[1,128], index: 8, kind: input, shape index: {}]
  %s9 = inlined_call_operand.vmem [shape: f32[1,128], index: 9, kind: input, shape index: {}]
  %s10 = inlined_call_operand.vmem [shape: f32[1,128], index: 10, kind: input, shape index: {}]
  %s11 = inlined_call_operand.hbm [shape: f32[16,128], index: 11, kind: output, shape index: {0}]
  %s12 = inlined_call_operand.hbm [shape: f32[16,128], index: 12, kind: output, shape index: {1}]
  %13 = xla_tuple %s11, %s12
  %s14 = sld [smem:[#allocation0]]
  $region117: #{tpu_custom_call.1} parent=0
    _
  %s16 = ssub.s32 1, %s14
  %s17 = scalar_select 0, %s16, %s14
  $region1: #{tpu_custom_call.1} parent=0
    #allocation2 [shape = 'u8[8192]{0}', space=vmem, size = 0x2000, scoped, tag = 'input window, operand 0, single buffered']
    #allocation3 [shape = 's32[2]{0}', space=sflag, size = 0x8, scoped, tag = 'scoped memory for tpu_custom_call.1']
    #allocation4 [shape = 's32[2]{0}', space=sflag, size = 0x8, scoped, tag = 'scoped memory for tpu_custom_call.1']
    #allocation5 [shape = 'u8[8192]{0}', space=vmem, size = 0x2000, scoped, tag = 'input window, operand 1, single buffered']
    #allocation6 [shape = 's32[1]{0}', space=sflag, size = 0x4, scoped, tag = 'scoped memory for tpu_custom_call.1']
    #allocation7 [shape = 'u8[8192]{0}', space=vmem, size = 0x2000, scoped, tag = 'input window, operand 2']
    #allocation8 [shape = 'u8[8192]{0}', space=vmem, size = 0x2000, scoped, tag = 'input window, operand 3']
    #allocation9 [shape = 'u8[8192]{0}', space=vmem, size = 0x2000, scoped, tag = 'input window, operand 4']
    #allocation10 [shape = 'u8[131072]{0}', space=vmem, size = 0x20000, scoped, tag = 'input window, operand 5, single buffered']
    #allocation11 [shape = 'u8[131072]{0}', space=vmem, size = 0x20000, scoped, tag = 'input window, operand 6, single buffered']
    #allocation12 [shape = 's32[1]{0}', space=sflag, size = 0x4, scoped, tag = 'scoped memory for tpu_custom_call.1']
    #allocation13 [shape = 'u8[131072]{0}', space=vmem, size = 0x20000, scoped, tag = 'input window, operand 7, single buffered']
    #allocation14 [shape = 'u8[8192]{0}', space=vmem, size = 0x2000, scoped, tag = 'output window, operand 0']
    #allocation15 [shape = 'u8[8192]{0}', space=vmem, size = 0x2000, scoped, tag = 'output window, operand 1']
    #allocation16 [shape = 's32[2]{0}', space=sflag, size = 0x8, scoped, tag = 'scoped memory for tpu_custom_call.1']
    %18 = vsyncpa [#allocation3], 0
    %19 = vsyncpa [#allocation6], 0
    %20 = vsyncpa [#allocation12], 0
    %21 = vsyncpa [#allocation4], 0
    %s22 = scalar_lea.sflag [#allocation4], 1
    %23 = vsyncpa %s22, 0
    %24 = vsyncpa [#allocation16], 0
    %s25 = scalar_lea.sflag [#allocation16], 1
    %26 = vsyncpa %s25, 0
    loop: start=0, step=1, limit=4
    $region2: #{tpu_custom_call.1} parent=1 // loop_pre_header
      _
    $region3: #{tpu_custom_call.1} parent=1 // loop_header
      %s28 = sphi 0, %s32
      %p29 = scmp.ge.s32.totalorder %s28, 4
      %s36 = sphi 0, %s36
      %s38 = sphi 0, %s36
      %s39 = sphi 0, %s38
      %s53 = sphi 0, %s39
      %s57 = sphi 0, %s57
      %s59 = sphi 0, %s57
      %s60 = sphi 0, %s59
      %s74 = sphi 0, %s60
      %s80 = sphi 0, %s82
      %s83 = sphi 0, %s80
      %s84 = sphi 0, %s83
      %s100 = sphi 0, %s84
      %s106 = sphi 0, %s108
      %s109 = sphi 0, %s106
      %s110 = sphi 0, %s109
      %s126 = sphi 0, %s110
      %s132 = sphi 0, %s134
      %s135 = sphi 0, %s132
      %s136 = sphi 0, %s135
      %s152 = sphi 0, %s136
      %s156 = sphi 0, %s156
      %s158 = sphi 0, %s156
      %s159 = sphi 0, %s158
      %s173 = sphi 0, %s159
      %s177 = sphi 0, %s177
      %s179 = sphi 0, %s177
      %s180 = sphi 0, %s179
      %s194 = sphi 0, %s180
      %s198 = sphi 0, %s198
      %s200 = sphi 0, %s198
      %s201 = sphi 0, %s200
      %s215 = sphi 0, %s201
      %s219 = sphi 0, %s219
      %s221 = sphi 0, %s219
      %s222 = sphi 0, %s221
      %s236 = sphi 0, %s222
      %s240 = sphi 0, %s240
      %s242 = sphi 0, %s240
      %s243 = sphi 0, %s242
      %s257 = sphi 0, %s243
      %s261 = sphi 0, %s261
      %s263 = sphi 0, %s261
      %s264 = sphi 0, %s263
      %s278 = sphi 0, %s264
      %s284 = sphi 0, %s286
      %s287 = sphi 0, %s284
      %s288 = sphi 0, %s287
      %s304 = sphi 0, %s288
      %s310 = sphi 0, %s312
      %s313 = sphi 0, %s310
      %s314 = sphi 0, %s313
      %s330 = sphi 0, %s314
    $region4: #{tpu_custom_call.1} parent=1 // loop_header_branch
      %31 = sbr.rel (%p29) target = $region8
    $region5: #{tpu_custom_call.1} parent=1 // loop_body
      %s33 = ssub.s32 %s28, 1
      %s34 = ssub.s32 %s28, 2
      %s35 = sadd.s32 %s28, 1
      %s37 = sadd.s32 %s36, 1
      %p40 = scmp.eq.s32.totalorder %s28, 1
      %p41 = scmp.ne.s32.totalorder %s36, %s38
      %p42 = scmp.eq.s32.totalorder %s28, 0
      %p43 = por %p41, %p42
      %p44 = scmp.ne.s32.totalorder %s36, %s38
      %p45 = scmp.eq.s32.totalorder %s33, 1
      %p46 = por %p44, %p45
      %p47 = scmp.ne.s32.totalorder %s38, %s39
      %p48 = scmp.eq.s32.totalorder %s33, 0
      %p49 = por %p47, %p48
      %p50 = scmp.ne.s32.totalorder %s38, %s39
      %p51 = scmp.eq.s32.totalorder %s34, 1
      %p52 = por %p50, %p51
      %p54 = scmp.ne.s32.totalorder %s39, %s53
      %p55 = scmp.eq.s32.totalorder %s34, 0
      %p56 = por %p54, %p55
      %s58 = sadd.s32 %s57, 1
      %p61 = scmp.eq.s32.totalorder %s28, 1
      %p62 = scmp.ne.s32.totalorder %s57, %s59
      %p63 = scmp.eq.s32.totalorder %s28, 0
      %p64 = por %p62, %p63
      %p65 = scmp.ne.s32.totalorder %s57, %s59
      %p66 = scmp.eq.s32.totalorder %s33, 1
      %p67 = por %p65, %p66
      %p68 = scmp.ne.s32.totalorder %s59, %s60
      %p69 = scmp.eq.s32.totalorder %s33, 0
      %p70 = por %p68, %p69
      %p71 = scmp.ne.s32.totalorder %s59, %s60
      %p72 = scmp.eq.s32.totalorder %s34, 1
      %p73 = por %p71, %p72
      %p75 = scmp.ne.s32.totalorder %s60, %s74
      %p76 = scmp.eq.s32.totalorder %s34, 0
      %p77 = por %p75, %p76
      %s78 = ssub.s32 %s28, %s35
      %p79 = scmp.eq.s32.totalorder %s78, 0
      %s81 = sadd.s32 %s80, 1
      %s82 = scalar_select %p79, %s80, %s81
      %p85 = pneg %p79
      %p86 = scmp.eq.s32.totalorder %s28, 1
      %p87 = por %p85, %p86
      %p88 = scmp.ne.s32.totalorder %s80, %s83
      %p89 = scmp.eq.s32.totalorder %s28, 0
      %p90 = por %p88, %p89
      %p91 = scmp.ne.s32.totalorder %s80, %s83
      %p92 = scmp.eq.s32.totalorder %s33, 1
      %p93 = por %p91, %p92
      %p94 = scmp.ne.s32.totalorder %s83, %s84
      %p95 = scmp.eq.s32.totalorder %s33, 0
      %p96 = por %p94, %p95
      %p97 = scmp.ne.s32.totalorder %s83, %s84
      %p98 = scmp.eq.s32.totalorder %s34, 1
      %p99 = por %p97, %p98
      %p101 = scmp.ne.s32.totalorder %s84, %s100
      %p102 = scmp.eq.s32.totalorder %s34, 0
      %p103 = por %p101, %p102
      %s104 = ssub.s32 %s28, %s35
      %p105 = scmp.eq.s32.totalorder %s104, 0
      %s107 = sadd.s32 %s106, 1
      %s108 = scalar_select %p105, %s106, %s107
      %p111 = pneg %p105
      %p112 = scmp.eq.s32.totalorder %s28, 1
      %p113 = por %p111, %p112
      %p114 = scmp.ne.s32.totalorder %s106, %s109
      %p115 = scmp.eq.s32.totalorder %s28, 0
      %p116 = por %p114, %p115
      %p117 = scmp.ne.s32.totalorder %s106, %s109
      %p118 = scmp.eq.s32.totalorder %s33, 1
      %p119 = por %p117, %p118
      %p120 = scmp.ne.s32.totalorder %s109, %s110
      %p121 = scmp.eq.s32.totalorder %s33, 0
      %p122 = por %p120, %p121
      %p123 = scmp.ne.s32.totalorder %s109, %s110
      %p124 = scmp.eq.s32.totalorder %s34, 1
      %p125 = por %p123, %p124
      %p127 = scmp.ne.s32.totalorder %s110, %s126
      %p128 = scmp.eq.s32.totalorder %s34, 0
      %p129 = por %p127, %p128
      %s130 = ssub.s32 %s28, %s35
      %p131 = scmp.eq.s32.totalorder %s130, 0
      %s133 = sadd.s32 %s132, 1
      %s134 = scalar_select %p131, %s132, %s133
      %p137 = pneg %p131
      %p138 = scmp.eq.s32.totalorder %s28, 1
      %p139 = por %p137, %p138
      %p140 = scmp.ne.s32.totalorder %s132, %s135
      %p141 = scmp.eq.s32.totalorder %s28, 0
      %p142 = por %p140, %p141
      %p143 = scmp.ne.s32.totalorder %s132, %s135
      %p144 = scmp.eq.s32.totalorder %s33, 1
      %p145 = por %p143, %p144
      %p146 = scmp.ne.s32.totalorder %s135, %s136
      %p147 = scmp.eq.s32.totalorder %s33, 0
      %p148 = por %p146, %p147
      %p149 = scmp.ne.s32.totalorder %s135, %s136
      %p150 = scmp.eq.s32.totalorder %s34, 1
      %p151 = por %p149, %p150
      %p153 = scmp.ne.s32.totalorder %s136, %s152
      %p154 = scmp.eq.s32.totalorder %s34, 0
      %p155 = por %p153, %p154
      %s157 = sadd.s32 %s156, 1
      %p160 = scmp.eq.s32.totalorder %s28, 1
      %p161 = scmp.ne.s32.totalorder %s156, %s158
      %p162 = scmp.eq.s32.totalorder %s28, 0
      %p163 = por %p161, %p162
      %p164 = scmp.ne.s32.totalorder %s156, %s158
      %p165 = scmp.eq.s32.totalorder %s33, 1
      %p166 = por %p164, %p165
      %p167 = scmp.ne.s32.totalorder %s158, %s159
      %p168 = scmp.eq.s32.totalorder %s33, 0
      %p169 = por %p167, %p168
      %p170 = scmp.ne.s32.totalorder %s158, %s159
      %p171 = scmp.eq.s32.totalorder %s34, 1
      %p172 = por %p170, %p171
      %p174 = scmp.ne.s32.totalorder %s159, %s173
      %p175 = scmp.eq.s32.totalorder %s34, 0
      %p176 = por %p174, %p175
      %s178 = sadd.s32 %s177, 1
      %p181 = scmp.eq.s32.totalorder %s28, 1
      %p182 = scmp.ne.s32.totalorder %s177, %s179
      %p183 = scmp.eq.s32.totalorder %s28, 0
      %p184 = por %p182, %p183
      %p185 = scmp.ne.s32.totalorder %s177, %s179
      %p186 = scmp.eq.s32.totalorder %s33, 1
      %p187 = por %p185, %p186
      %p188 = scmp.ne.s32.totalorder %s179, %s180
      %p189 = scmp.eq.s32.totalorder %s33, 0
      %p190 = por %p188, %p189
      %p191 = scmp.ne.s32.totalorder %s179, %s180
      %p192 = scmp.eq.s32.totalorder %s34, 1
      %p193 = por %p191, %p192
      %p195 = scmp.ne.s32.totalorder %s180, %s194
      %p196 = scmp.eq.s32.totalorder %s34, 0
      %p197 = por %p195, %p196
      %s199 = sadd.s32 %s198, 1
      %p202 = scmp.eq.s32.totalorder %s28, 1
      %p203 = scmp.ne.s32.totalorder %s198, %s200
      %p204 = scmp.eq.s32.totalorder %s28, 0
      %p205 = por %p203, %p204
      %p206 = scmp.ne.s32.totalorder %s198, %s200
      %p207 = scmp.eq.s32.totalorder %s33, 1
      %p208 = por %p206, %p207
      %p209 = scmp.ne.s32.totalorder %s200, %s201
      %p210 = scmp.eq.s32.totalorder %s33, 0
      %p211 = por %p209, %p210
      %p212 = scmp.ne.s32.totalorder %s200, %s201
      %p213 = scmp.eq.s32.totalorder %s34, 1
      %p214 = por %p212, %p213
      %p216 = scmp.ne.s32.totalorder %s201, %s215
      %p217 = scmp.eq.s32.totalorder %s34, 0
      %p218 = por %p216, %p217
      %s220 = sadd.s32 %s219, 1
      %p223 = scmp.eq.s32.totalorder %s28, 1
      %p224 = scmp.ne.s32.totalorder %s219, %s221
      %p225 = scmp.eq.s32.totalorder %s28, 0
      %p226 = por %p224, %p225
      %p227 = scmp.ne.s32.totalorder %s219, %s221
      %p228 = scmp.eq.s32.totalorder %s33, 1
      %p229 = por %p227, %p228
      %p230 = scmp.ne.s32.totalorder %s221, %s222
      %p231 = scmp.eq.s32.totalorder %s33, 0
      %p232 = por %p230, %p231
      %p233 = scmp.ne.s32.totalorder %s221, %s222
      %p234 = scmp.eq.s32.totalorder %s34, 1
      %p235 = por %p233, %p234
      %p237 = scmp.ne.s32.totalorder %s222, %s236
      %p238 = scmp.eq.s32.totalorder %s34, 0
      %p239 = por %p237, %p238
      %s241 = sadd.s32 %s240, 1
      %p244 = scmp.eq.s32.totalorder %s28, 1
      %p245 = scmp.ne.s32.totalorder %s240, %s242
      %p246 = scmp.eq.s32.totalorder %s28, 0
      %p247 = por %p245, %p246
      %p248 = scmp.ne.s32.totalorder %s240, %s242
      %p249 = scmp.eq.s32.totalorder %s33, 1
      %p250 = por %p248, %p249
      %p251 = scmp.ne.s32.totalorder %s242, %s243
      %p252 = scmp.eq.s32.totalorder %s33, 0
      %p253 = por %p251, %p252
      %p254 = scmp.ne.s32.totalorder %s242, %s243
      %p255 = scmp.eq.s32.totalorder %s34, 1
      %p256 = por %p254, %p255
      %p258 = scmp.ne.s32.totalorder %s243, %s257
      %p259 = scmp.eq.s32.totalorder %s34, 0
      %p260 = por %p258, %p259
      %s262 = sadd.s32 %s261, 1
      %p265 = scmp.eq.s32.totalorder %s28, 1
      %p266 = scmp.ne.s32.totalorder %s261, %s263
      %p267 = scmp.eq.s32.totalorder %s28, 0
      %p268 = por %p266, %p267
      %p269 = scmp.ne.s32.totalorder %s261, %s263
      %p270 = scmp.eq.s32.totalorder %s33, 1
      %p271 = por %p269, %p270
      %p272 = scmp.ne.s32.totalorder %s263, %s264
      %p273 = scmp.eq.s32.totalorder %s33, 0
      %p274 = por %p272, %p273
      %p275 = scmp.ne.s32.totalorder %s263, %s264
      %p276 = scmp.eq.s32.totalorder %s34, 1
      %p277 = por %p275, %p276
      %p279 = scmp.ne.s32.totalorder %s264, %s278
      %p280 = scmp.eq.s32.totalorder %s34, 0
      %p281 = por %p279, %p280
      %s282 = ssub.s32 %s28, %s35
      %p283 = scmp.eq.s32.totalorder %s282, 0
      %s285 = sadd.s32 %s284, 1
      %s286 = scalar_select %p283, %s284, %s285
      %p289 = pneg %p283
      %p290 = scmp.eq.s32.totalorder %s28, 1
      %p291 = por %p289, %p290
      %p292 = scmp.ne.s32.totalorder %s284, %s287
      %p293 = scmp.eq.s32.totalorder %s28, 0
      %p294 = por %p292, %p293
      %p295 = scmp.ne.s32.totalorder %s284, %s287
      %p296 = scmp.eq.s32.totalorder %s33, 1
      %p297 = por %p295, %p296
      %p298 = scmp.ne.s32.totalorder %s287, %s288
      %p299 = scmp.eq.s32.totalorder %s33, 0
      %p300 = por %p298, %p299
      %p301 = scmp.ne.s32.totalorder %s287, %s288
      %p302 = scmp.eq.s32.totalorder %s34, 1
      %p303 = por %p301, %p302
      %p305 = scmp.ne.s32.totalorder %s288, %s304
      %p306 = scmp.eq.s32.totalorder %s34, 0
      %p307 = por %p305, %p306
      %s308 = ssub.s32 %s28, %s35
      %p309 = scmp.eq.s32.totalorder %s308, 0
      %s311 = sadd.s32 %s310, 1
      %s312 = scalar_select %p309, %s310, %s311
      %p315 = pneg %p309
      %p316 = scmp.eq.s32.totalorder %s28, 1
      %p317 = por %p315, %p316
      %p318 = scmp.ne.s32.totalorder %s310, %s313
      %p319 = scmp.eq.s32.totalorder %s28, 0
      %p320 = por %p318, %p319
      %p321 = scmp.ne.s32.totalorder %s310, %s313
      %p322 = scmp.eq.s32.totalorder %s33, 1
      %p323 = por %p321, %p322
      %p324 = scmp.ne.s32.totalorder %s313, %s314
      %p325 = scmp.eq.s32.totalorder %s33, 0
      %p326 = por %p324, %p325
      %p327 = scmp.ne.s32.totalorder %s313, %s314
      %p328 = scmp.eq.s32.totalorder %s34, 1
      %p329 = por %p327, %p328
      %p331 = scmp.ne.s32.totalorder %s314, %s330
      %p332 = scmp.eq.s32.totalorder %s34, 0
      %p333 = por %p331, %p332
      %p334 = scmp.le.s32.totalorder 1, %s28
      %p335 = scmp.lt.s32.totalorder %s28, 3
      %p336 = pnand %p334, %p335
      %p337 = pneg %p336
      // Predicated region
      $region9: #{tpu_custom_call.1} parent=5 // pred_check
        _
      $region10: #{tpu_custom_call.1} parent=5 // pred_check_branch
        %339 = sbr.rel (%p336) target = $region12
      $region11: #{tpu_custom_call.1} parent=5 // pred_region
        %s340 = ssub.s32 %s28, 1
        // Predicated region
        $region13: #{tpu_custom_call.1} parent=11 // pred_check
          %p341 = pneg %p49
        $region14: #{tpu_custom_call.1} parent=11 // pred_check_branch
          %343 = sbr.rel (%p341) target = $region16
        $region15: #{tpu_custom_call.1} parent=11 // pred_region
          %s345 = ssub.s32 256, 256
          %346 = vsyncadd [#allocation3], %s345
          %s347 = sshll.u32 [#allocation2], 4
          %s348 = int_to_ptr.vmem [resolvable:$true] %s347
          %353 = dma.hbm_to_vmem [thread:$0]  %s0, 256, %s348, [#allocation3], 128, 128, 8
        $region16: #{tpu_custom_call.1} parent=11 // pred_fallthru
          _
        // Predicated region
        $region17: #{tpu_custom_call.1} parent=11 // pred_check
          %p354 = pneg %p70
        $region18: #{tpu_custom_call.1} parent=11 // pred_check_branch
          %356 = sbr.rel (%p354) target = $region20
        $region19: #{tpu_custom_call.1} parent=11 // pred_region
          %s358 = ssub.s32 256, 256
          %359 = vsyncadd [#allocation6], %s358
          %s360 = sshll.u32 [#allocation5], 4
          %s361 = int_to_ptr.vmem [resolvable:$true] %s360
          %366 = dma.hbm_to_vmem [thread:$0]  %s1, 256, %s361, [#allocation6], 128, 128, 8
        $region20: #{tpu_custom_call.1} parent=11 // pred_fallthru
          _
        // Predicated region
        $region21: #{tpu_custom_call.1} parent=11 // pred_check
          %p367 = pneg %p169
        $region22: #{tpu_custom_call.1} parent=11 // pred_check_branch
          %369 = sbr.rel (%p367) target = $region24
        $region23: #{tpu_custom_call.1} parent=11 // pred_region
          %s371 = ssub.s32 4096, 4096
          %372 = vsyncadd [#allocation6], %s371
          %s373 = sshll.u32 [#allocation10], 4
          %s374 = int_to_ptr.vmem [resolvable:$true] %s373
          %379 = dma.hbm_to_vmem [thread:$0]  %s5, 4096, %s374, [#allocation6], 128, 128, 8
        $region24: #{tpu_custom_call.1} parent=11 // pred_fallthru
          _
        // Predicated region
        $region25: #{tpu_custom_call.1} parent=11 // pred_check
          %p380 = pneg %p190
        $region26: #{tpu_custom_call.1} parent=11 // pred_check_branch
          %382 = sbr.rel (%p380) target = $region28
        $region27: #{tpu_custom_call.1} parent=11 // pred_region
          %s384 = ssub.s32 4096, 4096
          %385 = vsyncadd [#allocation12], %s384
          %s386 = sshll.u32 [#allocation11], 4
          %s387 = int_to_ptr.vmem [resolvable:$true] %s386
          %392 = dma.hbm_to_vmem [thread:$0]  %s6, 4096, %s387, [#allocation12], 128, 128, 8
        $region28: #{tpu_custom_call.1} parent=11 // pred_fallthru
          _
        // Predicated region
        $region29: #{tpu_custom_call.1} parent=11 // pred_check
          %p393 = pneg %p211
        $region30: #{tpu_custom_call.1} parent=11 // pred_check_branch
          %395 = sbr.rel (%p393) target = $region32
        $region31: #{tpu_custom_call.1} parent=11 // pred_region
          %s397 = ssub.s32 4096, 4096
          %398 = vsyncadd [#allocation12], %s397
          %s399 = sshll.u32 [#allocation13], 4
          %s400 = int_to_ptr.vmem [resolvable:$true] %s399
          %405 = dma.hbm_to_vmem [thread:$0]  %s7, 4096, %s400, [#allocation12], 128, 128, 8
        $region32: #{tpu_custom_call.1} parent=11 // pred_fallthru
          _
        // Predicated region
        $region33: #{tpu_custom_call.1} parent=11 // pred_check
          %p406 = pneg %p232
        $region34: #{tpu_custom_call.1} parent=11 // pred_check_branch
          %408 = sbr.rel (%p406) target = $region36
        $region35: #{tpu_custom_call.1} parent=11 // pred_region
          _
        $region36: #{tpu_custom_call.1} parent=11 // pred_fallthru
          _
        // Predicated region
        $region37: #{tpu_custom_call.1} parent=11 // pred_check
          %p409 = pneg %p253
        $region38: #{tpu_custom_call.1} parent=11 // pred_check_branch
          %411 = sbr.rel (%p409) target = $region40
        $region39: #{tpu_custom_call.1} parent=11 // pred_region
          _
        $region40: #{tpu_custom_call.1} parent=11 // pred_fallthru
          _
        // Predicated region
        $region41: #{tpu_custom_call.1} parent=11 // pred_check
          %p412 = pneg %p274
        $region42: #{tpu_custom_call.1} parent=11 // pred_check_branch
          %414 = sbr.rel (%p412) target = $region44
        $region43: #{tpu_custom_call.1} parent=11 // pred_region
          _
        $region44: #{tpu_custom_call.1} parent=11 // pred_fallthru
          _
      $region12: #{tpu_custom_call.1} parent=5 // pred_fallthru
        _
      %p415 = scmp.lt.s32.totalorder %s28, 2
      // Predicated region
      $region45: #{tpu_custom_call.1} parent=5 // pred_check
        %p416 = pneg %p415
      $region46: #{tpu_custom_call.1} parent=5 // pred_check_branch
        %418 = sbr.rel (%p416) target = $region48
      $region47: #{tpu_custom_call.1} parent=5 // pred_region
        // Predicated region
        $region49: #{tpu_custom_call.1} parent=47 // pred_check
          %p419 = pneg %p90
        $region50: #{tpu_custom_call.1} parent=47 // pred_check_branch
          %421 = sbr.rel (%p419) target = $region52
        $region51: #{tpu_custom_call.1} parent=47 // pred_region
          %s422 = sand.u32 %s28, 1
          %s423 = scalar_lea.sflag [#allocation3], %s422
          %s424 = sand.u32 %s80, 1
          %s425 = smul.addr %s424, 8
          %s426 = scalar_lea.vmem [#allocation7], %s425
          %s428 = ssub.s32 128, 128
          %429 = vsyncadd %s423, %s428
          %s430 = smul.addr %s28, 128
          %s431 = scalar_lea.hbm %s2, %s430
          %s433 = sshll.u32 %s426, 4
          %s434 = int_to_ptr.vmem [resolvable:$true] %s433
          %436 = dma.hbm_to_vmem [thread:$0]  %s431, 128, %s434, %s423
        $region52: #{tpu_custom_call.1} parent=47 // pred_fallthru
          _
        // Predicated region
        $region53: #{tpu_custom_call.1} parent=47 // pred_check
          %p437 = pneg %p116
        $region54: #{tpu_custom_call.1} parent=47 // pred_check_branch
          %439 = sbr.rel (%p437) target = $region56
        $region55: #{tpu_custom_call.1} parent=47 // pred_region
          %s440 = sand.u32 %s28, 1
          %s441 = scalar_lea.sflag [#allocation3], %s440
          %s442 = sand.u32 %s106, 1
          %s443 = smul.addr %s442, 8
          %s444 = scalar_lea.vmem [#allocation8], %s443
          %s446 = ssub.s32 128, 128
          %447 = vsyncadd %s441, %s446
          %s448 = smul.addr %s28, 128
          %s449 = scalar_lea.hbm %s3, %s448
          %s451 = sshll.u32 %s444, 4
          %s452 = int_to_ptr.vmem [resolvable:$true] %s451
          %454 = dma.hbm_to_vmem [thread:$0]  %s449, 128, %s452, %s441
        $region56: #{tpu_custom_call.1} parent=47 // pred_fallthru
          _
        // Predicated region
        $region57: #{tpu_custom_call.1} parent=47 // pred_check
          %p455 = pneg %p142
        $region58: #{tpu_custom_call.1} parent=47 // pred_check_branch
          %457 = sbr.rel (%p455) target = $region60
        $region59: #{tpu_custom_call.1} parent=47 // pred_region
          %s458 = sand.u32 %s28, 1
          %s459 = scalar_lea.sflag [#allocation3], %s458
          %s460 = sand.u32 %s132, 1
          %s461 = smul.addr %s460, 8
          %s462 = scalar_lea.vmem [#allocation9], %s461
          %s464 = ssub.s32 128, 128
          %465 = vsyncadd %s459, %s464
          %s466 = smul.addr %s28, 128
          %s467 = scalar_lea.hbm %s4, %s466
          %s469 = sshll.u32 %s462, 4
          %s470 = int_to_ptr.vmem [resolvable:$true] %s469
          %472 = dma.hbm_to_vmem [thread:$0]  %s467, 128, %s470, %s459
        $region60: #{tpu_custom_call.1} parent=47 // pred_fallthru
          _
      $region48: #{tpu_custom_call.1} parent=5 // pred_fallthru
        _
      %p473 = scmp.le.s32.totalorder 1, %s28
      %p474 = scmp.lt.s32.totalorder %s28, 3
      %p475 = pnand %p473, %p474
      %p476 = pneg %p475
      // Predicated region
      $region61: #{tpu_custom_call.1} parent=5 // pred_check
        _
      $region62: #{tpu_custom_call.1} parent=5 // pred_check_branch
        %478 = sbr.rel (%p475) target = $region64
      $region63: #{tpu_custom_call.1} parent=5 // pred_region
        %s479 = ssub.s32 %s28, 1
        // Predicated region
        $region65: #{tpu_custom_call.1} parent=63 // pred_check
          %p480 = pneg %p49
        $region66: #{tpu_custom_call.1} parent=63 // pred_check_branch
          %482 = sbr.rel (%p480) target = $region68
        $region67: #{tpu_custom_call.1} parent=63 // pred_region
          %483 = dma.done [#allocation3], 256
        $region68: #{tpu_custom_call.1} parent=63 // pred_fallthru
          _
        // Predicated region
        $region69: #{tpu_custom_call.1} parent=63 // pred_check
          %p484 = pneg %p70
        $region70: #{tpu_custom_call.1} parent=63 // pred_check_branch
          %486 = sbr.rel (%p484) target = $region72
        $region71: #{tpu_custom_call.1} parent=63 // pred_region
          %487 = dma.done [#allocation6], 256
        $region72: #{tpu_custom_call.1} parent=63 // pred_fallthru
          _
        %s488 = sand.u32 %s33, 1
        %s489 = scalar_lea.sflag [#allocation3], %s488
        %s490 = sand.u32 %s83, 1
        %s491 = smul.addr %s490, 8
        %s492 = scalar_lea.vmem [#allocation7], %s491
        // Predicated region
        $region73: #{tpu_custom_call.1} parent=63 // pred_check
          %p493 = pneg %p96
        $region74: #{tpu_custom_call.1} parent=63 // pred_check_branch
          %495 = sbr.rel (%p493) target = $region76
        $region75: #{tpu_custom_call.1} parent=63 // pred_region
          %496 = dma.done %s489, 128
        $region76: #{tpu_custom_call.1} parent=63 // pred_fallthru
          _
        %s497 = sand.u32 %s33, 1
        %s498 = scalar_lea.sflag [#allocation3], %s497
        %s499 = sand.u32 %s109, 1
        %s500 = smul.addr %s499, 8
        %s501 = scalar_lea.vmem [#allocation8], %s500
        // Predicated region
        $region77: #{tpu_custom_call.1} parent=63 // pred_check
          %p502 = pneg %p122
        $region78: #{tpu_custom_call.1} parent=63 // pred_check_branch
          %504 = sbr.rel (%p502) target = $region80
        $region79: #{tpu_custom_call.1} parent=63 // pred_region
          %505 = dma.done %s498, 128
        $region80: #{tpu_custom_call.1} parent=63 // pred_fallthru
          _
        %s506 = sand.u32 %s33, 1
        %s507 = scalar_lea.sflag [#allocation3], %s506
        %s508 = sand.u32 %s135, 1
        %s509 = smul.addr %s508, 8
        %s510 = scalar_lea.vmem [#allocation9], %s509
        // Predicated region
        $region81: #{tpu_custom_call.1} parent=63 // pred_check
          %p511 = pneg %p148
        $region82: #{tpu_custom_call.1} parent=63 // pred_check_branch
          %513 = sbr.rel (%p511) target = $region84
        $region83: #{tpu_custom_call.1} parent=63 // pred_region
          %514 = dma.done %s507, 128
        $region84: #{tpu_custom_call.1} parent=63 // pred_fallthru
          _
        // Predicated region
        $region85: #{tpu_custom_call.1} parent=63 // pred_check
          %p515 = pneg %p169
        $region86: #{tpu_custom_call.1} parent=63 // pred_check_branch
          %517 = sbr.rel (%p515) target = $region88
        $region87: #{tpu_custom_call.1} parent=63 // pred_region
          %518 = dma.done [#allocation6], 4096
        $region88: #{tpu_custom_call.1} parent=63 // pred_fallthru
          _
        // Predicated region
        $region89: #{tpu_custom_call.1} parent=63 // pred_check
          %p519 = pneg %p190
        $region90: #{tpu_custom_call.1} parent=63 // pred_check_branch
          %521 = sbr.rel (%p519) target = $region92
        $region91: #{tpu_custom_call.1} parent=63 // pred_region
          %522 = dma.done [#allocation12], 4096
        $region92: #{tpu_custom_call.1} parent=63 // pred_fallthru
          _
        // Predicated region
        $region93: #{tpu_custom_call.1} parent=63 // pred_check
          %p523 = pneg %p211
        $region94: #{tpu_custom_call.1} parent=63 // pred_check_branch
          %525 = sbr.rel (%p523) target = $region96
        $region95: #{tpu_custom_call.1} parent=63 // pred_region
          %526 = dma.done [#allocation12], 4096
        $region96: #{tpu_custom_call.1} parent=63 // pred_fallthru
          _
        %p527 = pneg %p49
        %p528 = pneg %p46
        %p529 = pneg %p70
        %p530 = pneg %p67
        %s531 = sand.u32 %s33, 1
        %s532 = scalar_lea.sflag [#allocation3], %s531
        %s533 = sand.u32 %s83, 1
        %s534 = smul.addr %s533, 8
        %s535 = scalar_lea.vmem [#allocation7], %s534
        %p536 = pneg %p96
        %p537 = pneg %p93
        %s538 = sand.u32 %s33, 1
        %s539 = scalar_lea.sflag [#allocation3], %s538
        %s540 = sand.u32 %s109, 1
        %s541 = smul.addr %s540, 8
        %s542 = scalar_lea.vmem [#allocation8], %s541
        %p543 = pneg %p122
        %p544 = pneg %p119
        %s545 = sand.u32 %s33, 1
        %s546 = scalar_lea.sflag [#allocation3], %s545
        %s547 = sand.u32 %s135, 1
        %s548 = smul.addr %s547, 8
        %s549 = scalar_lea.vmem [#allocation9], %s548
        %p550 = pneg %p148
        %p551 = pneg %p145
        %p552 = pneg %p169
        %p553 = pneg %p166
        %p554 = pneg %p190
        %p555 = pneg %p187
        %p556 = pneg %p211
        %p557 = pneg %p208
        %p558 = pneg %p232
        %p559 = pneg %p229
        %p560 = pneg %p253
        %p561 = pneg %p250
        %p562 = pneg %p274
        %p563 = pneg %p271
        %p564 = pneg %p300
        %p565 = pneg %p297
        %s566 = sand.u32 %s287, 1
        %s567 = scalar_lea.sflag [#allocation4], %s566
        %s568 = sand.u32 %s287, 1
        %s569 = smul.addr %s568, 8
        %s570 = scalar_lea.vmem [#allocation14], %s569
        %p571 = pneg %p326
        %p572 = pneg %p323
        %s573 = sand.u32 %s313, 1
        %s574 = scalar_lea.sflag [#allocation16], %s573
        %s575 = sand.u32 %s313, 1
        %s576 = smul.addr %s575, 8
        %s577 = scalar_lea.vmem [#allocation15], %s576
        %s579 = smul.u32 %s33, 8
        %v580 = vld [vmem:[%s492] sm:$0xff]
        %v581 = vpack.c.bf16 %v580, %v580
        %v582 = vld [vmem:[#allocation2] sm:$0xff]
        %v583 = vld [vmem:[#allocation2 + $0x8] sm:$0xff]
        %v584 = vpack.c.bf16 %v583, %v582
        %vm585 = vcmask 130048
        %v587 = vsel %vm585, %v581, 0
        %589 = vmatprep.subr.bf16.mxu0 0
        %590 = vmatpush1.bf16.msra.mxu0 %v584
        %591 = vmatprep.subr.bf16.mxu0 0
        %592 = vmatpush1.bf16.msra.mxu0 0
        %593 = vmatprep.subr.bf16.mxu0 0
        %594 = vmatpush1.bf16.msra.mxu0 0
        %595 = vmatprep.subr.bf16.mxu0 0
        %596 = vmatpush1.bf16.msra.mxu0 0
        %597 = vmatprep.subr.bf16.mxu0 0
        %598 = vmatpush1.bf16.msra.mxu0 0
        %599 = vmatprep.subr.bf16.mxu0 0
        %600 = vmatpush1.bf16.msra.mxu0 0
        %601 = vmatprep.subr.bf16.mxu0 0
        %602 = vmatpush1.bf16.msra.mxu0 0
        %603 = vmatprep.subr.bf16.mxu0 0
        %604 = vmatpush1.bf16.msra.mxu0 0
        %605 = vmatprep.subr.bf16.mxu0 0
        %606 = vmatpush1.bf16.msra.mxu0 0
        %607 = vmatprep.subr.bf16.mxu0 0
        %608 = vmatpush1.bf16.msra.mxu0 0
        %609 = vmatprep.subr.bf16.mxu0 0
        %610 = vmatpush1.bf16.msra.mxu0 0
        %611 = vmatprep.subr.bf16.mxu0 0
        %612 = vmatpush1.bf16.msra.mxu0 0
        %613 = vmatprep.subr.bf16.mxu0 0
        %614 = vmatpush1.bf16.msra.mxu0 0
        %615 = vmatprep.subr.bf16.mxu0 0
        %616 = vmatpush1.bf16.msra.mxu0 0
        %617 = vmatprep.subr.bf16.mxu0 0
        %618 = vmatpush1.bf16.msra.mxu0 0
        %619 = vmatprep.subr.bf16.mxu0 0
        %620 = vmatpush1.bf16.msra.mxu0 0
        %621 = vmatprep.mubr.bf16.mxu0 0
        %622 = vmatmul.mubr.bf16.gmra.mrb[0].mxu0 %v587
        %v623 = vpop.f32.mrb[0].mxu0
        %v624 = vadd.f32 0.0, %v623
        %v625 = vpop.f32.mrb[0].mxu0
        %v626 = vpop.f32.mrb[0].mxu0
        %v627 = vpop.f32.mrb[0].mxu0
        %628 = vdwg.mxu0
        %s629 = scalar_lea.vmem [#allocation5], %s579
        %v630 = vld [vmem:[%s629] sm:$0xff]
        %v631 = vpack.c.bf16 %v630, %v630
        %v632 = vpack.c.bf16 %v624, %v624
        %v633 = vld [vmem:[#allocation10] sm:$0xff]
        %v634 = vld [vmem:[#allocation10 + $0x8] sm:$0xff]
        %v635 = vld [vmem:[#allocation10 + $0x10] sm:$0xff]
        %v636 = vld [vmem:[#allocation10 + $0x18] sm:$0xff]
        %v637 = vld [vmem:[#allocation10 + $0x20] sm:$0xff]
        %v638 = vld [vmem:[#allocation10 + $0x28] sm:$0xff]
        %v639 = vld [vmem:[#allocation10 + $0x30] sm:$0xff]
        %v640 = vld [vmem:[#allocation10 + $0x38] sm:$0xff]
        %v641 = vld [vmem:[#allocation10 + $0x40] sm:$0xff]
        %v642 = vld [vmem:[#allocation10 + $0x48] sm:$0xff]
        %v643 = vld [vmem:[#allocation10 + $0x50] sm:$0xff]
        %v644 = vld [vmem:[#allocation10 + $0x58] sm:$0xff]
        %v645 = vld [vmem:[#allocation10 + $0x60] sm:$0xff]
        %v646 = vld [vmem:[#allocation10 + $0x68] sm:$0xff]
        %v647 = vld [vmem:[#allocation10 + $0x70] sm:$0xff]
        %v648 = vld [vmem:[#allocation10 + $0x78] sm:$0xff]
        %v649 = vld [vmem:[#allocation10 + $0x80] sm:$0xff]
        %v650 = vld [vmem:[#allocation10 + $0x88] sm:$0xff]
        %v651 = vld [vmem:[#allocation10 + $0x90] sm:$0xff]
        %v652 = vld [vmem:[#allocation10 + $0x98] sm:$0xff]
        %v653 = vld [vmem:[#allocation10 + $0xa0] sm:$0xff]
        %v654 = vld [vmem:[#allocation10 + $0xa8] sm:$0xff]
        %v655 = vld [vmem:[#allocation10 + $0xb0] sm:$0xff]
        %v656 = vld [vmem:[#allocation10 + $0xb8] sm:$0xff]
        %v657 = vld [vmem:[#allocation10 + $0xc0] sm:$0xff]
        %v658 = vld [vmem:[#allocation10 + $0xc8] sm:$0xff]
        %v659 = vld [vmem:[#allocation10 + $0xd0] sm:$0xff]
        %v660 = vld [vmem:[#allocation10 + $0xd8] sm:$0xff]
        %v661 = vld [vmem:[#allocation10 + $0xe0] sm:$0xff]
        %v662 = vld [vmem:[#allocation10 + $0xe8] sm:$0xff]
        %v663 = vld [vmem:[#allocation10 + $0xf0] sm:$0xff]
        %v664 = vld [vmem:[#allocation10 + $0xf8] sm:$0xff]
        %v665 = vpack.c.bf16 %v634, %v633
        %v666 = vpack.c.bf16 %v636, %v635
        %v667 = vpack.c.bf16 %v638, %v637
        %v668 = vpack.c.bf16 %v640, %v639
        %v669 = vpack.c.bf16 %v642, %v641
        %v670 = vpack.c.bf16 %v644, %v643
        %v671 = vpack.c.bf16 %v646, %v645
        %v672 = vpack.c.bf16 %v648, %v647
        %v673 = vpack.c.bf16 %v650, %v649
        %v674 = vpack.c.bf16 %v652, %v651
        %v675 = vpack.c.bf16 %v654, %v653
        %v676 = vpack.c.bf16 %v656, %v655
        %v677 = vpack.c.bf16 %v658, %v657
        %v678 = vpack.c.bf16 %v660, %v659
        %v679 = vpack.c.bf16 %v662, %v661
        %v680 = vpack.c.bf16 %v664, %v663
        %v681 = vld [vmem:[%s8] sm:$0x1]
        %v683 = vlaneseq
        %v684 = vshrl.u32 %v683, 7
        %v685 = vsub.s32 0, %v684
        %v686 = vrot.slane %v681, %v685
        %688 = vmatprep.subr.bf16.mxu0 0
        %689 = vmatpush1.bf16.msra.mxu0 %v665
        %690 = vmatprep.subr.bf16.mxu0 0
        %691 = vmatpush1.bf16.msra.mxu0 %v666
        %692 = vmatprep.subr.bf16.mxu0 0
        %693 = vmatpush1.bf16.msra.mxu0 %v667
        %694 = vmatprep.subr.bf16.mxu0 0
        %695 = vmatpush1.bf16.msra.mxu0 %v668
        %696 = vmatprep.subr.bf16.mxu0 0
        %697 = vmatpush1.bf16.msra.mxu0 %v669
        %698 = vmatprep.subr.bf16.mxu0 0
        %699 = vmatpush1.bf16.msra.mxu0 %v670
        %700 = vmatprep.subr.bf16.mxu0 0
        %701 = vmatpush1.bf16.msra.mxu0 %v671
        %702 = vmatprep.subr.bf16.mxu0 0
        %703 = vmatpush1.bf16.msra.mxu0 %v672
        %704 = vmatprep.subr.bf16.mxu0 0
        %705 = vmatpush1.bf16.msra.mxu0 %v673
        %706 = vmatprep.subr.bf16.mxu0 0
        %707 = vmatpush1.bf16.msra.mxu0 %v674
        %708 = vmatprep.subr.bf16.mxu0 0
        %709 = vmatpush1.bf16.msra.mxu0 %v675
        %710 = vmatprep.subr.bf16.mxu0 0
        %711 = vmatpush1.bf16.msra.mxu0 %v676
        %712 = vmatprep.subr.bf16.mxu0 0
        %713 = vmatpush1.bf16.msra.mxu0 %v677
        %714 = vmatprep.subr.bf16.mxu0 0
        %715 = vmatpush1.bf16.msra.mxu0 %v678
        %716 = vmatprep.subr.bf16.mxu0 0
        %717 = vmatpush1.bf16.msra.mxu0 %v679
        %718 = vmatprep.subr.bf16.mxu0 0
        %719 = vmatpush1.bf16.msra.mxu0 %v680
        %720 = vmatprep.mubr.bf16.mxu0 %v631
        %721 = vmatmul.mubr.bf16.gmra.mrb[0].mxu0 %v632
        %v722 = vpop.f32.mrb[0].mxu0
        %v723 = vadd.f32 %v686, %v722
        %v724 = vpop.f32.mrb[0].mxu0
        %v725 = vpop.f32.mrb[0].mxu0
        %v726 = vpop.f32.mrb[0].mxu0
        %727 = vdwg.mxu0
        %v728 = vld [vmem:[%s501] sm:$0xff]
        %v729 = vpack.c.bf16 %v728, %v728
        %v730 = vld [vmem:[#allocation5] sm:$0xff]
        %v731 = vld [vmem:[#allocation5 + $0x8] sm:$0xff]
        %v732 = vpack.c.bf16 %v731, %v730
        %v734 = vsel %vm585, %v729, 0
        %736 = vmatprep.subr.bf16.mxu0 0
        %737 = vmatpush1.bf16.msra.mxu0 %v732
        %738 = vmatprep.subr.bf16.mxu0 0
        %739 = vmatpush1.bf16.msra.mxu0 0
        %740 = vmatprep.subr.bf16.mxu0 0
        %741 = vmatpush1.bf16.msra.mxu0 0
        %742 = vmatprep.subr.bf16.mxu0 0
        %743 = vmatpush1.bf16.msra.mxu0 0
        %744 = vmatprep.subr.bf16.mxu0 0
        %745 = vmatpush1.bf16.msra.mxu0 0
        %746 = vmatprep.subr.bf16.mxu0 0
        %747 = vmatpush1.bf16.msra.mxu0 0
        %748 = vmatprep.subr.bf16.mxu0 0
        %749 = vmatpush1.bf16.msra.mxu0 0
        %750 = vmatprep.subr.bf16.mxu0 0
        %751 = vmatpush1.bf16.msra.mxu0 0
        %752 = vmatprep.subr.bf16.mxu0 0
        %753 = vmatpush1.bf16.msra.mxu0 0
        %754 = vmatprep.subr.bf16.mxu0 0
        %755 = vmatpush1.bf16.msra.mxu0 0
        %756 = vmatprep.subr.bf16.mxu0 0
        %757 = vmatpush1.bf16.msra.mxu0 0
        %758 = vmatprep.subr.bf16.mxu0 0
        %759 = vmatpush1.bf16.msra.mxu0 0
        %760 = vmatprep.subr.bf16.mxu0 0
        %761 = vmatpush1.bf16.msra.mxu0 0
        %762 = vmatprep.subr.bf16.mxu0 0
        %763 = vmatpush1.bf16.msra.mxu0 0
        %764 = vmatprep.subr.bf16.mxu0 0
        %765 = vmatpush1.bf16.msra.mxu0 0
        %766 = vmatprep.subr.bf16.mxu0 0
        %767 = vmatpush1.bf16.msra.mxu0 0
        %768 = vmatprep.mubr.bf16.mxu0 0
        %769 = vmatmul.mubr.bf16.gmra.mrb[0].mxu0 %v734
        %v770 = vpop.f32.mrb[0].mxu0
        %v771 = vadd.f32 0.0, %v770
        %v772 = vpop.f32.mrb[0].mxu0
        %v773 = vpop.f32.mrb[0].mxu0
        %v774 = vpop.f32.mrb[0].mxu0
        %775 = vdwg.mxu0
        %s776 = scalar_lea.vmem [#allocation2], %s579
        %v777 = vld [vmem:[%s776] sm:$0xff]
        %v778 = vpack.c.bf16 %v777, %v777
        %v779 = vpack.c.bf16 %v771, %v771
        %v780 = vld [vmem:[#allocation11] sm:$0xff]
        %v781 = vld [vmem:[#allocation11 + $0x8] sm:$0xff]
        %v782 = vld [vmem:[#allocation11 + $0x10] sm:$0xff]
        %v783 = vld [vmem:[#allocation11 + $0x18] sm:$0xff]
        %v784 = vld [vmem:[#allocation11 + $0x20] sm:$0xff]
        %v785 = vld [vmem:[#allocation11 + $0x28] sm:$0xff]
        %v786 = vld [vmem:[#allocation11 + $0x30] sm:$0xff]
        %v787 = vld [vmem:[#allocation11 + $0x38] sm:$0xff]
        %v788 = vld [vmem:[#allocation11 + $0x40] sm:$0xff]
        %v789 = vld [vmem:[#allocation11 + $0x48] sm:$0xff]
        %v790 = vld [vmem:[#allocation11 + $0x50] sm:$0xff]
        %v791 = vld [vmem:[#allocation11 + $0x58] sm:$0xff]
        %v792 = vld [vmem:[#allocation11 + $0x60] sm:$0xff]
        %v793 = vld [vmem:[#allocation11 + $0x68] sm:$0xff]
        %v794 = vld [vmem:[#allocation11 + $0x70] sm:$0xff]
        %v795 = vld [vmem:[#allocation11 + $0x78] sm:$0xff]
        %v796 = vld [vmem:[#allocation11 + $0x80] sm:$0xff]
        %v797 = vld [vmem:[#allocation11 + $0x88] sm:$0xff]
        %v798 = vld [vmem:[#allocation11 + $0x90] sm:$0xff]
        %v799 = vld [vmem:[#allocation11 + $0x98] sm:$0xff]
        %v800 = vld [vmem:[#allocation11 + $0xa0] sm:$0xff]
        %v801 = vld [vmem:[#allocation11 + $0xa8] sm:$0xff]
        %v802 = vld [vmem:[#allocation11 + $0xb0] sm:$0xff]
        %v803 = vld [vmem:[#allocation11 + $0xb8] sm:$0xff]
        %v804 = vld [vmem:[#allocation11 + $0xc0] sm:$0xff]
        %v805 = vld [vmem:[#allocation11 + $0xc8] sm:$0xff]
        %v806 = vld [vmem:[#allocation11 + $0xd0] sm:$0xff]
        %v807 = vld [vmem:[#allocation11 + $0xd8] sm:$0xff]
        %v808 = vld [vmem:[#allocation11 + $0xe0] sm:$0xff]
        %v809 = vld [vmem:[#allocation11 + $0xe8] sm:$0xff]
        %v810 = vld [vmem:[#allocation11 + $0xf0] sm:$0xff]
        %v811 = vld [vmem:[#allocation11 + $0xf8] sm:$0xff]
        %v812 = vpack.c.bf16 %v781, %v780
        %v813 = vpack.c.bf16 %v783, %v782
        %v814 = vpack.c.bf16 %v785, %v784
        %v815 = vpack.c.bf16 %v787, %v786
        %v816 = vpack.c.bf16 %v789, %v788
        %v817 = vpack.c.bf16 %v791, %v790
        %v818 = vpack.c.bf16 %v793, %v792
        %v819 = vpack.c.bf16 %v795, %v794
        %v820 = vpack.c.bf16 %v797, %v796
        %v821 = vpack.c.bf16 %v799, %v798
        %v822 = vpack.c.bf16 %v801, %v800
        %v823 = vpack.c.bf16 %v803, %v802
        %v824 = vpack.c.bf16 %v805, %v804
        %v825 = vpack.c.bf16 %v807, %v806
        %v826 = vpack.c.bf16 %v809, %v808
        %v827 = vpack.c.bf16 %v811, %v810
        %v828 = vld [vmem:[%s9] sm:$0x1]
        %v830 = vlaneseq
        %v831 = vshrl.u32 %v830, 7
        %v832 = vsub.s32 0, %v831
        %v833 = vrot.slane %v828, %v832
        %835 = vmatprep.subr.bf16.mxu0 0
        %836 = vmatpush1.bf16.msra.mxu0 %v812
        %837 = vmatprep.subr.bf16.mxu0 0
        %838 = vmatpush1.bf16.msra.mxu0 %v813
        %839 = vmatprep.subr.bf16.mxu0 0
        %840 = vmatpush1.bf16.msra.mxu0 %v814
        %841 = vmatprep.subr.bf16.mxu0 0
        %842 = vmatpush1.bf16.msra.mxu0 %v815
        %843 = vmatprep.subr.bf16.mxu0 0
        %844 = vmatpush1.bf16.msra.mxu0 %v816
        %845 = vmatprep.subr.bf16.mxu0 0
        %846 = vmatpush1.bf16.msra.mxu0 %v817
        %847 = vmatprep.subr.bf16.mxu0 0
        %848 = vmatpush1.bf16.msra.mxu0 %v818
        %849 = vmatprep.subr.bf16.mxu0 0
        %850 = vmatpush1.bf16.msra.mxu0 %v819
        %851 = vmatprep.subr.bf16.mxu0 0
        %852 = vmatpush1.bf16.msra.mxu0 %v820
        %853 = vmatprep.subr.bf16.mxu0 0
        %854 = vmatpush1.bf16.msra.mxu0 %v821
        %855 = vmatprep.subr.bf16.mxu0 0
        %856 = vmatpush1.bf16.msra.mxu0 %v822
        %857 = vmatprep.subr.bf16.mxu0 0
        %858 = vmatpush1.bf16.msra.mxu0 %v823
        %859 = vmatprep.subr.bf16.mxu0 0
        %860 = vmatpush1.bf16.msra.mxu0 %v824
        %861 = vmatprep.subr.bf16.mxu0 0
        %862 = vmatpush1.bf16.msra.mxu0 %v825
        %863 = vmatprep.subr.bf16.mxu0 0
        %864 = vmatpush1.bf16.msra.mxu0 %v826
        %865 = vmatprep.subr.bf16.mxu0 0
        %866 = vmatpush1.bf16.msra.mxu0 %v827
        %867 = vmatprep.mubr.bf16.mxu0 %v778
        %868 = vmatmul.mubr.bf16.gmra.mrb[0].mxu0 %v779
        %v869 = vpop.f32.mrb[0].mxu0
        %v870 = vadd.f32 %v833, %v869
        %v871 = vpop.f32.mrb[0].mxu0
        %v872 = vpop.f32.mrb[0].mxu0
        %v873 = vpop.f32.mrb[0].mxu0
        %874 = vdwg.mxu0
        %v875 = vld [vmem:[%s510] sm:$0xff]
        %v876 = vpack.c.bf16 %v875, %v875
        %v878 = vsel %vm585, %v876, 0
        %880 = vmatprep.subr.bf16.mxu0 0
        %881 = vmatpush1.bf16.msra.mxu0 %v584
        %882 = vmatprep.subr.bf16.mxu0 0
        %883 = vmatpush1.bf16.msra.mxu0 0
        %884 = vmatprep.subr.bf16.mxu0 0
        %885 = vmatpush1.bf16.msra.mxu0 0
        %886 = vmatprep.subr.bf16.mxu0 0
        %887 = vmatpush1.bf16.msra.mxu0 0
        %888 = vmatprep.subr.bf16.mxu0 0
        %889 = vmatpush1.bf16.msra.mxu0 0
        %890 = vmatprep.subr.bf16.mxu0 0
        %891 = vmatpush1.bf16.msra.mxu0 0
        %892 = vmatprep.subr.bf16.mxu0 0
        %893 = vmatpush1.bf16.msra.mxu0 0
        %894 = vmatprep.subr.bf16.mxu0 0
        %895 = vmatpush1.bf16.msra.mxu0 0
        %896 = vmatprep.subr.bf16.mxu0 0
        %897 = vmatpush1.bf16.msra.mxu0 0
        %898 = vmatprep.subr.bf16.mxu0 0
        %899 = vmatpush1.bf16.msra.mxu0 0
        %900 = vmatprep.subr.bf16.mxu0 0
        %901 = vmatpush1.bf16.msra.mxu0 0
        %902 = vmatprep.subr.bf16.mxu0 0
        %903 = vmatpush1.bf16.msra.mxu0 0
        %904 = vmatprep.subr.bf16.mxu0 0
        %905 = vmatpush1.bf16.msra.mxu0 0
        %906 = vmatprep.subr.bf16.mxu0 0
        %907 = vmatpush1.bf16.msra.mxu0 0
        %908 = vmatprep.subr.bf16.mxu0 0
        %909 = vmatpush1.bf16.msra.mxu0 0
        %910 = vmatprep.subr.bf16.mxu0 0
        %911 = vmatpush1.bf16.msra.mxu0 0
        %912 = vmatprep.mubr.bf16.mxu0 0
        %913 = vmatmul.mubr.bf16.gmra.mrb[0].mxu0 %v878
        %v914 = vpop.f32.mrb[0].mxu0
        %v915 = vadd.f32 0.0, %v914
        %v916 = vpop.f32.mrb[0].mxu0
        %v917 = vpop.f32.mrb[0].mxu0
        %v918 = vpop.f32.mrb[0].mxu0
        %919 = vdwg.mxu0
        %v920 = vpack.c.bf16 %v915, %v915
        %v921 = vld [vmem:[#allocation13] sm:$0xff]
        %v922 = vld [vmem:[#allocation13 + $0x8] sm:$0xff]
        %v923 = vld [vmem:[#allocation13 + $0x10] sm:$0xff]
        %v924 = vld [vmem:[#allocation13 + $0x18] sm:$0xff]
        %v925 = vld [vmem:[#allocation13 + $0x20] sm:$0xff]
        %v926 = vld [vmem:[#allocation13 + $0x28] sm:$0xff]
        %v927 = vld [vmem:[#allocation13 + $0x30] sm:$0xff]
        %v928 = vld [vmem:[#allocation13 + $0x38] sm:$0xff]
        %v929 = vld [vmem:[#allocation13 + $0x40] sm:$0xff]
        %v930 = vld [vmem:[#allocation13 + $0x48] sm:$0xff]
        %v931 = vld [vmem:[#allocation13 + $0x50] sm:$0xff]
        %v932 = vld [vmem:[#allocation13 + $0x58] sm:$0xff]
        %v933 = vld [vmem:[#allocation13 + $0x60] sm:$0xff]
        %v934 = vld [vmem:[#allocation13 + $0x68] sm:$0xff]
        %v935 = vld [vmem:[#allocation13 + $0x70] sm:$0xff]
        %v936 = vld [vmem:[#allocation13 + $0x78] sm:$0xff]
        %v937 = vld [vmem:[#allocation13 + $0x80] sm:$0xff]
        %v938 = vld [vmem:[#allocation13 + $0x88] sm:$0xff]
        %v939 = vld [vmem:[#allocation13 + $0x90] sm:$0xff]
        %v940 = vld [vmem:[#allocation13 + $0x98] sm:$0xff]
        %v941 = vld [vmem:[#allocation13 + $0xa0] sm:$0xff]
        %v942 = vld [vmem:[#allocation13 + $0xa8] sm:$0xff]
        %v943 = vld [vmem:[#allocation13 + $0xb0] sm:$0xff]
        %v944 = vld [vmem:[#allocation13 + $0xb8] sm:$0xff]
        %v945 = vld [vmem:[#allocation13 + $0xc0] sm:$0xff]
        %v946 = vld [vmem:[#allocation13 + $0xc8] sm:$0xff]
        %v947 = vld [vmem:[#allocation13 + $0xd0] sm:$0xff]
        %v948 = vld [vmem:[#allocation13 + $0xd8] sm:$0xff]
        %v949 = vld [vmem:[#allocation13 + $0xe0] sm:$0xff]
        %v950 = vld [vmem:[#allocation13 + $0xe8] sm:$0xff]
        %v951 = vld [vmem:[#allocation13 + $0xf0] sm:$0xff]
        %v952 = vld [vmem:[#allocation13 + $0xf8] sm:$0xff]
        %v953 = vpack.c.bf16 %v922, %v921
        %v954 = vpack.c.bf16 %v924, %v923
        %v955 = vpack.c.bf16 %v926, %v925
        %v956 = vpack.c.bf16 %v928, %v927
        %v957 = vpack.c.bf16 %v930, %v929
        %v958 = vpack.c.bf16 %v932, %v931
        %v959 = vpack.c.bf16 %v934, %v933
        %v960 = vpack.c.bf16 %v936, %v935
        %v961 = vpack.c.bf16 %v938, %v937
        %v962 = vpack.c.bf16 %v940, %v939
        %v963 = vpack.c.bf16 %v942, %v941
        %v964 = vpack.c.bf16 %v944, %v943
        %v965 = vpack.c.bf16 %v946, %v945
        %v966 = vpack.c.bf16 %v948, %v947
        %v967 = vpack.c.bf16 %v950, %v949
        %v968 = vpack.c.bf16 %v952, %v951
        %v969 = vld [vmem:[%s10] sm:$0x1]
        %v971 = vlaneseq
        %v972 = vshrl.u32 %v971, 7
        %v973 = vsub.s32 0, %v972
        %v974 = vrot.slane %v969, %v973
        %976 = vmatprep.subr.bf16.mxu0 0
        %977 = vmatpush1.bf16.msra.mxu0 %v953
        %978 = vmatprep.subr.bf16.mxu0 0
        %979 = vmatpush1.bf16.msra.mxu0 %v954
        %980 = vmatprep.subr.bf16.mxu0 0
        %981 = vmatpush1.bf16.msra.mxu0 %v955
        %982 = vmatprep.subr.bf16.mxu0 0
        %983 = vmatpush1.bf16.msra.mxu0 %v956
        %984 = vmatprep.subr.bf16.mxu0 0
        %985 = vmatpush1.bf16.msra.mxu0 %v957
        %986 = vmatprep.subr.bf16.mxu0 0
        %987 = vmatpush1.bf16.msra.mxu0 %v958
        %988 = vmatprep.subr.bf16.mxu0 0
        %989 = vmatpush1.bf16.msra.mxu0 %v959
        %990 = vmatprep.subr.bf16.mxu0 0
        %991 = vmatpush1.bf16.msra.mxu0 %v960
        %992 = vmatprep.subr.bf16.mxu0 0
        %993 = vmatpush1.bf16.msra.mxu0 %v961
        %994 = vmatprep.subr.bf16.mxu0 0
        %995 = vmatpush1.bf16.msra.mxu0 %v962
        %996 = vmatprep.subr.bf16.mxu0 0
        %997 = vmatpush1.bf16.msra.mxu0 %v963
        %998 = vmatprep.subr.bf16.mxu0 0
        %999 = vmatpush1.bf16.msra.mxu0 %v964
        %1000 = vmatprep.subr.bf16.mxu0 0
        %1001 = vmatpush1.bf16.msra.mxu0 %v965
        %1002 = vmatprep.subr.bf16.mxu0 0
        %1003 = vmatpush1.bf16.msra.mxu0 %v966
        %1004 = vmatprep.subr.bf16.mxu0 0
        %1005 = vmatpush1.bf16.msra.mxu0 %v967
        %1006 = vmatprep.subr.bf16.mxu0 0
        %1007 = vmatpush1.bf16.msra.mxu0 %v968
        %1008 = vmatprep.mubr.bf16.mxu0 %v778
        %1009 = vmatmul.mubr.bf16.gmra.mrb[0].mxu0 %v920
        %v1010 = vpop.f32.mrb[0].mxu0
        %v1011 = vadd.f32 %v974, %v1010
        %v1012 = vpop.f32.mrb[0].mxu0
        %v1013 = vpop.f32.mrb[0].mxu0
        %v1014 = vpop.f32.mrb[0].mxu0
        %1015 = vdwg.mxu0
        %v1016 = vadd.f32 %v870, %v1011
        %vm1017 = vcmp.ge.f32.partialorder %v1016, 0.0
        %v1018 = vmul.f32 %v1016, 0.01
        %v1019 = vsel %vm1017, %v1016, %v1018
        %1020 = vst [vmem:[%s570] sm:$0xff] %v1019
        %vm1021 = vcmp.ge.f32.partialorder %v723, 0.0
        %v1022 = vmul.f32 %v723, 0.01
        %v1023 = vsel %vm1021, %v723, %v1022
        %1024 = vst [vmem:[%s577] sm:$0xff] %v1023
        %s1025 = sand.u32 %s287, 1
        %s1026 = scalar_lea.sflag [#allocation4], %s1025
        %s1027 = sand.u32 %s287, 1
        %s1028 = smul.addr %s1027, 8
        %s1029 = scalar_lea.vmem [#allocation14], %s1028
        %s1030 = sand.u32 %s313, 1
        %s1031 = scalar_lea.sflag [#allocation16], %s1030
        %s1032 = sand.u32 %s313, 1
        %s1033 = smul.addr %s1032, 8
        %s1034 = scalar_lea.vmem [#allocation15], %s1033
        // Predicated region
        $region97: #{tpu_custom_call.1} parent=63 // pred_check
          %p1035 = pneg %p297
        $region98: #{tpu_custom_call.1} parent=63 // pred_check_branch
          %1037 = sbr.rel (%p1035) target = $region100
        $region99: #{tpu_custom_call.1} parent=63 // pred_region
          %s1039 = ssub.s32 128, 128
          %1040 = vsyncadd %s1026, %s1039
          %s1041 = smul.addr %s33, 128
          %s1042 = scalar_lea.hbm %s11, %s1041
          %s1044 = sshll.u32 %s1029, 4
          %s1045 = int_to_ptr.vmem [resolvable:$true] %s1044
          %1047 = dma.vmem_to_hbm [thread:$0]  %s1045, 128, %s1042, %s1026
        $region100: #{tpu_custom_call.1} parent=63 // pred_fallthru
          _
        // Predicated region
        $region101: #{tpu_custom_call.1} parent=63 // pred_check
          %p1048 = pneg %p323
        $region102: #{tpu_custom_call.1} parent=63 // pred_check_branch
          %1050 = sbr.rel (%p1048) target = $region104
        $region103: #{tpu_custom_call.1} parent=63 // pred_region
          %s1052 = ssub.s32 128, 128
          %1053 = vsyncadd %s1031, %s1052
          %s1054 = smul.addr %s33, 128
          %s1055 = scalar_lea.hbm %s12, %s1054
          %s1057 = sshll.u32 %s1034, 4
          %s1058 = int_to_ptr.vmem [resolvable:$true] %s1057
          %1060 = dma.vmem_to_hbm [thread:$0]  %s1058, 128, %s1055, %s1031
        $region104: #{tpu_custom_call.1} parent=63 // pred_fallthru
          _
      $region64: #{tpu_custom_call.1} parent=5 // pred_fallthru
        _
      %p1061 = scmp.le.s32.totalorder 2, %s28
      // Predicated region
      $region105: #{tpu_custom_call.1} parent=5 // pred_check
        %p1062 = pneg %p1061
      $region106: #{tpu_custom_call.1} parent=5 // pred_check_branch
        %1064 = sbr.rel (%p1062) target = $region108
      $region107: #{tpu_custom_call.1} parent=5 // pred_region
        %s1065 = ssub.s32 %s28, 2
        // Predicated region
        $region109: #{tpu_custom_call.1} parent=107 // pred_check
          %p1066 = pneg %p303
        $region110: #{tpu_custom_call.1} parent=107 // pred_check_branch
          %1068 = sbr.rel (%p1066) target = $region112
        $region111: #{tpu_custom_call.1} parent=107 // pred_region
          %s1069 = sand.u32 %s288, 1
          %s1070 = scalar_lea.sflag [#allocation4], %s1069
          %s1071 = sand.u32 %s288, 1
          %s1072 = smul.addr %s1071, 8
          %s1073 = scalar_lea.vmem [#allocation14], %s1072
          %1074 = dma.done %s1070, 128
        $region112: #{tpu_custom_call.1} parent=107 // pred_fallthru
          _
        // Predicated region
        $region113: #{tpu_custom_call.1} parent=107 // pred_check
          %p1075 = pneg %p329
        $region114: #{tpu_custom_call.1} parent=107 // pred_check_branch
          %1077 = sbr.rel (%p1075) target = $region116
        $region115: #{tpu_custom_call.1} parent=107 // pred_region
          %s1078 = sand.u32 %s314, 1
          %s1079 = scalar_lea.sflag [#allocation16], %s1078
          %s1080 = sand.u32 %s314, 1
          %s1081 = smul.addr %s1080, 8
          %s1082 = scalar_lea.vmem [#allocation15], %s1081
          %1083 = dma.done %s1079, 128
        $region116: #{tpu_custom_call.1} parent=107 // pred_fallthru
          _
      $region108: #{tpu_custom_call.1} parent=5 // pred_fallthru
        _
    $region6: #{tpu_custom_call.1} parent=1 // loop_footer
      %s32 = sadd.s32 1, %s28
    $region7: #{tpu_custom_call.1} parent=1 // loop_footer_branch
      %27 = sbr.rel target = $region3
    $region8: #{tpu_custom_call.1} parent=1 // loop_exit
      _
    %1084 = vsyncpa [#allocation3], 1
    %s1085 = scalar_lea.sflag [#allocation3], 1
    %1086 = vsyncpa %s1085, 1
    %1087 = vsyncpa [#allocation6], 1
    %1088 = vsyncpa [#allocation12], 1
    %1089 = vsyncpa [#allocation4], 1
    %s1090 = scalar_lea.sflag [#allocation4], 1
    %1091 = vsyncpa %s1090, 1
    %1092 = vsyncpa [#allocation16], 1
    %s1093 = scalar_lea.sflag [#allocation16], 1
    %1094 = vsyncpa %s1093, 1

</llo_original>
